<compile_context>
chip_gen: v6e
topology: v6e:2x2x1
jax: 0.10.0
libtpu: 0.0.40
codegen_flags: <defaults>
</compile_context>

<pallas_src>
import functools

import jax
import jax.numpy as jnp
from jax.experimental import pallas as pl
from jax.experimental.pallas import tpu as pltpu


_VMEM_LIMIT = 64 * 1024 * 1024      # above the 16/32 MiB scoped defaults, <= physical everywhere
_NEG = -1e30                        # "minus infinity" for padded vocab columns (exp() -> 0)


def _round_up(x, m):
    return (x + m - 1) // m * m


# ----------------------------- math helpers (traced inside & outside kernels)

def _gelu(x):
    # original-BERT tanh-approximation GELU (f32 math)
    return 0.5 * x * (1.0 + jnp.tanh(0.7978845608028654 * (x + 0.044715 * x * x * x)))


def _layernorm(x, g, b, eps=1e-12):
    mu = jnp.mean(x, axis=-1, keepdims=True)
    var = jnp.mean((x - mu) ** 2, axis=-1, keepdims=True)
    return (x - mu) * jax.lax.rsqrt(var + eps) * g + b


# ----------------------------- Pallas kernels -------------------------------

def encoder_layer_kernel(x_ref, w_ref, b_ref, g_ref, beta_ref, o_ref):
    """Encoder stand-in layer: LayerNorm(GELU(x @ W + b)).

    x / W are bf16 (MXU native), accumulation and element-wise math in f32,
    output cast to bf16 (halves the ctx HBM round trip into the MLM kernel).
    """
    h = jnp.dot(x_ref[...], w_ref[...], preferred_element_type=jnp.float32)
    h = _gelu(h + b_ref[...])
    o_ref[...] = _layernorm(h, g_ref[...], beta_ref[...]).astype(o_ref.dtype)


def mask_lm_kernel(x_ref, w_ref, b_ref, logits_ref, lse_ref, m_sc, s_sc):
    """MaskedLanguageModel = LogSoftmax(Linear(hidden, vocab)).

    Grid = (row_tiles, vocab_tiles), vocab innermost ("arbitrary"):
      * x block (tile_n, H) is VMEM-resident for the whole vocab sweep
        (index map independent of the vocab index),
      * (H, tile_v) decoder slabs + bias stream through the pipeline,
      * raw logits are written lane-dense per vocab tile,
      * the log-sum-exp is accumulated online (running max / sum-exp in VMEM
        scratch) and emitted once per row tile on the last vocab step.
    """
    j = pl.program_id(1)

    @pl.when(j == 0)
    def _():
        m_sc[...] = jnp.full(m_sc.shape, -jnp.inf, m_sc.dtype)
        s_sc[...] = jnp.zeros(s_sc.shape, s_sc.dtype)

    logits = jnp.dot(x_ref[...], w_ref[...],
                     preferred_element_type=jnp.float32) + b_ref[...]
    logits_ref[...] = logits

    m_prev = m_sc[...]
    m_new = jnp.maximum(m_prev, jnp.max(logits, axis=-1, keepdims=True))
    s_sc[...] = (s_sc[...] * jnp.exp(m_prev - m_new)
                 + jnp.sum(jnp.exp(logits - m_new), axis=-1, keepdims=True))
    m_sc[...] = m_new

    @pl.when(j == pl.num_programs(1) - 1)
    def _():
        lse_ref[...] = m_sc[...] + jnp.log(s_sc[...])


# ----------------------------- pallas_call wrappers --------------------------

def encoder_layer(x, w, b, g, beta, *, tile_rows=256):
    """x: (N, H) bf16, w: (H, H) bf16, b/g/beta: (1, H) f32 -> (N, H) bf16."""
    n, hdim = x.shape
    tn = min(tile_rows, _round_up(n, 8))
    n_pad = _round_up(n, tn)
    if n_pad != n:
        x = jnp.pad(x, ((0, n_pad - n), (0, 0)))

    out = pl.pallas_call(
        encoder_layer_kernel,
        out_shape=jax.ShapeDtypeStruct((n_pad, hdim), jnp.bfloat16),
        grid=(n_pad // tn,),
        in_specs=[
            pl.BlockSpec((tn, hdim), lambda i: (i, 0)),
            pl.BlockSpec((hdim, hdim), lambda i: (0, 0)),
            pl.BlockSpec((1, hdim), lambda i: (0, 0)),
            pl.BlockSpec((1, hdim), lambda i: (0, 0)),
            pl.BlockSpec((1, hdim), lambda i: (0, 0)),
        ],
        out_specs=pl.BlockSpec((tn, hdim), lambda i: (i, 0)),
        compiler_params=pltpu.CompilerParams(
            dimension_semantics=("parallel",),
            vmem_limit_bytes=_VMEM_LIMIT),
    )(x, w, b, g, beta)
    return out[:n]


def mask_lm_head(x, w, b, *, tile_rows=256, tile_v=2048):
    """LogSoftmax(x @ w + b).  x: (N, H) bf16, w: (H, V) bf16, b: (1, V) f32.
    Returns (N, V) f32 log-probabilities."""
    n, hdim = x.shape
    v = w.shape[1]

    tn = min(tile_rows, _round_up(n, 8))
    n_pad = _round_up(n, tn)
    tv = min(tile_v, _round_up(v, 128))      # lane-aligned vocab tile
    v_pad = _round_up(v, tv)

    if n_pad != n:
        x = jnp.pad(x, ((0, n_pad - n), (0, 0)))
    if v_pad != v:
        w = jnp.pad(w, ((0, 0), (0, v_pad - v)))
        b = jnp.pad(b, ((0, 0), (0, v_pad - v)), constant_values=_NEG)

    logits, lse = pl.pallas_call(
        mask_lm_kernel,
        out_shape=(
            jax.ShapeDtypeStruct((n_pad, v_pad), jnp.float32),   # raw logits
            jax.ShapeDtypeStruct((n_pad, 1), jnp.float32),       # per-row LSE
        ),
        grid=(n_pad // tn, v_pad // tv),
        in_specs=[
            pl.BlockSpec((tn, hdim), lambda i, j: (i, 0)),   # resident over vocab sweep
            pl.BlockSpec((hdim, tv), lambda i, j: (0, j)),   # streamed weight slab
            pl.BlockSpec((1, tv), lambda i, j: (0, j)),      # streamed bias slab
        ],
        out_specs=(
            pl.BlockSpec((tn, tv), lambda i, j: (i, j)),     # lane-dense logits
            pl.BlockSpec((tn, 1), lambda i, j: (i, 0)),      # written once per row tile
        ),
        scratch_shapes=[pltpu.VMEM((tn, 1), jnp.float32),    # running max
                        pltpu.VMEM((tn, 1), jnp.float32)],   # running sum-exp
        compiler_params=pltpu.CompilerParams(
            dimension_semantics=("parallel", "arbitrary"),
            vmem_limit_bytes=_VMEM_LIMIT),
    )(x, w, b)

    # Final normalisation is a pure broadcast-subtract; the vocab reduction
    # already happened online inside the kernel.
    return logits[:n, :v] - lse[:n]


# ----------------------------- params ----------------------------------------

def init_params(key, *, vocab_size, hidden_size, action_space, max_len):
    ks = jax.random.split(key, 5)
    std = 0.02
    h, v, a = hidden_size, vocab_size, action_space
    return {
        # encoder stand-in
        "tok_emb": std * jax.random.normal(ks[0], (v, h), jnp.float32),
        "pos_emb": std * jax.random.normal(ks[1], (max_len, h), jnp.float32),
        "enc_w": (std * jax.random.normal(ks[2], (h, h), jnp.float32)).astype(jnp.bfloat16),
        "enc_b": jnp.zeros((1, h), jnp.float32),
        "enc_g": jnp.ones((1, h), jnp.float32),
        "enc_beta": jnp.zeros((1, h), jnp.float32),
        # MaskedLanguageModel: Linear(hidden, vocab) stored transposed (in, out)
        "mlm_w": (std * jax.random.normal(ks[3], (h, v), jnp.float32)).astype(jnp.bfloat16),
        "mlm_b": jnp.zeros((1, v), jnp.float32),
        # NextActionPrediction: Linear(hidden, action_space), tiny -> plain JAX
        "act_w": std * jax.random.normal(ks[4], (h, a), jnp.float32),
        "act_b": jnp.zeros((a,), jnp.float32),
    }


# ----------------------------- model ----------------------------------------

@functools.partial(jax.jit, static_argnames=("tile_rows", "tile_v"))
def bert_img_action_sep_pretrain(params, seq, seq_mask, seq_lengths, labels,
                                 isnext=None, f_t_all=None, *,
                                 tile_rows=256, tile_v=2048):
    """Returns (next_action_output, mask_lm_output, loss) like the PyTorch
    module.  Note the reference computes mask_loss but never uses it
    (loss = next_loss only), so it is omitted here."""
    B, L = seq.shape
    H = params["tok_emb"].shape[1]
    V = params["mlm_w"].shape[1]

    # --- encoder stand-in (glue: embedding gather + mask), hot path in Pallas
    # TODO(synk): BertImgEncoder (transformer/LSTM stack, vision fusion via
    # f_t_all, reverse_input, seq_lengths, top_lstm, dropout) not in source.
    emb = params["tok_emb"][seq] + params["pos_emb"][:L][None]
    x = (emb * seq_mask[..., None].astype(jnp.float32)).astype(jnp.bfloat16)
    ctx = encoder_layer(
        x.reshape(B * L, H),
        params["enc_w"], params["enc_b"], params["enc_g"], params["enc_beta"],
        tile_rows=tile_rows,
    ).reshape(B, L, H)

    vision_len = 0 if f_t_all is None else f_t_all.shape[1]
    cls_part = ctx[:, vision_len, :]
    lang_part = ctx[:, vision_len + 1:, :]
    l_lang = lang_part.shape[1]

    # --- MaskedLanguageModel: LogSoftmax(Linear(H, V)) on the language part
    mask_lm_output = mask_lm_head(
        lang_part.reshape(B * l_lang, H),
        params["mlm_w"], params["mlm_b"],
        tile_rows=tile_rows, tile_v=tile_v,
    ).reshape(B, l_lang, V)

    # --- NextActionPrediction on [CLS]: (B,H)@(H,A) is microseconds of work,
    #     so it stays in plain JAX/XLA (a pallas_call would be pure overhead).
    logits_a = cls_part.astype(jnp.float32) @ params["act_w"] + params["act_b"]
    next_action_output = jax.nn.log_softmax(logits_a, axis=-1)

    # --- loss = NLLLoss(ignore_index=0)(next_action_output, isnext)
    if isnext is None:
        loss = jnp.float32(0.0)
    else:
        tgt = isnext.astype(jnp.int32)
        valid = tgt != 0                                   # ignore_index=0
        safe = jnp.clip(tgt, 0, next_action_output.shape[-1] - 1)
        picked = jnp.take_along_axis(next_action_output, safe[:, None], axis=-1)[:, 0]
        n_valid = jnp.sum(valid.astype(jnp.float32))
        # PyTorch mean-reduction NLLLoss returns NaN when everything is
        # ignored; guarded to 0 here.
        loss = jnp.sum(jnp.where(valid, -picked, 0.0)) / jnp.maximum(n_valid, 1.0)

    return next_action_output, mask_lm_output, loss


# ----------------------------- pure-JAX reference (correctness check) --------

def _reference_forward(params, seq, seq_mask, isnext):
    B, L = seq.shape
    H = params["tok_emb"].shape[1]
    emb = params["tok_emb"][seq] + params["pos_emb"][:L][None]
    x = (emb * seq_mask[..., None]).astype(jnp.bfloat16).reshape(B * L, H)
    h = jnp.dot(x, params["enc_w"], preferred_element_type=jnp.float32) + params["enc_b"]
    ctx = _layernorm(_gelu(h), params["enc_g"], params["enc_beta"]).astype(jnp.bfloat16)
    ctx = ctx.reshape(B, L, H)
    cls_part = ctx[:, 0, :]
    lang = ctx[:, 1:, :].reshape(B * (L - 1), H)
    logits = jnp.dot(lang, params["mlm_w"], preferred_element_type=jnp.float32) + params["mlm_b"]
    mask_lm = jax.nn.log_softmax(logits, axis=-1).reshape(B, L - 1, -1)
    logits_a = cls_part.astype(jnp.float32) @ params["act_w"] + params["act_b"]
    action = jax.nn.log_softmax(logits_a, axis=-1)
    tgt = isnext.astype(jnp.int32)
    valid = tgt != 0
    safe = jnp.clip(tgt, 0, action.shape[-1] - 1)
    picked = jnp.take_along_axis(action, safe[:, None], axis=-1)[:, 0]
    loss = (jnp.sum(jnp.where(valid, -picked, 0.0))
            / jnp.maximum(jnp.sum(valid.astype(jnp.float32)), 1.0))
    return action, mask_lm, loss


# ----------------------------- demo ------------------------------------------

if __name__ == "__main__":
    B, L, H, V, A = 2, 8, 128, 256, 8

    key = jax.random.PRNGKey(0)
    k_param, k_seq, k_lab, _ = jax.random.split(key, 4)

    params = init_params(k_param, vocab_size=V, hidden_size=H,
                         action_space=A, max_len=L)

    seq = jax.random.randint(k_seq, (B, L), 1, V, dtype=jnp.int32)
    seq_mask = jnp.ones((B, L), jnp.float32)
    seq_lengths = jnp.full((B,), L, jnp.int32)
    labels = jax.random.randint(k_lab, (B, L), 0, V, dtype=jnp.int32)
    isnext = jnp.array([1, 0], jnp.int32)     # sample 1 ignored (ignore_index=0)

    # tile_v=128 < V so the online-LSE vocab sweep really runs over >1 tile.
    action_scores, mask_lm_output, loss = bert_img_action_sep_pretrain(
        params, seq, seq_mask, seq_lengths, labels, isnext,
        tile_rows=128, tile_v=128)
    jax.block_until_ready((action_scores, mask_lm_output, loss))

    assert action_scores.shape == (B, A)
    assert mask_lm_output.shape == (B, L - 1, V)
    assert loss.shape == ()

    ref_action, ref_mask_lm, ref_loss = _reference_forward(params, seq, seq_mask, isnext)
    assert jnp.allclose(action_scores, ref_action, atol=3e-2, rtol=3e-2)
    assert jnp.allclose(mask_lm_output, ref_mask_lm, atol=3e-2, rtol=3e-2)
    assert jnp.allclose(loss, ref_loss, atol=3e-2, rtol=3e-2)

    print("KERNEL_OK")
</pallas_src>

<mosaic_0001>
module attributes {stable_mosaic.version = 11 : i64} {
  func.func @encoder_layer_kernel(%arg0: i32, %arg1: memref<16x128xbf16, #tpu.memory_space<vmem>>, %arg2: memref<128x128xbf16, #tpu.memory_space<vmem>>, %arg3: memref<1x128xf32, #tpu.memory_space<vmem>>, %arg4: memref<1x128xf32, #tpu.memory_space<vmem>>, %arg5: memref<1x128xf32, #tpu.memory_space<vmem>>, %arg6: memref<16x128xbf16, #tpu.memory_space<vmem>>) attributes {dimension_semantics = [#tpu.dimension_semantics<parallel>], iteration_bounds = array<i64: 1>, scalar_prefetch = 0 : i64, scratch_operands = 0 : i64, tpu.core_type = #tpu.core_type<tc>, window_params = [{transform_indices = @transform_0, window_bounds = array<i64: 16, 128>}, {pipeline_mode = #tpu.pipeline_mode<synchronous>, transform_indices = @transform_1, window_bounds = array<i64: 128, 128>}, {pipeline_mode = #tpu.pipeline_mode<synchronous>, transform_indices = @transform_2, window_bounds = array<i64: 1, 128>}, {pipeline_mode = #tpu.pipeline_mode<synchronous>, transform_indices = @transform_3, window_bounds = array<i64: 1, 128>}, {pipeline_mode = #tpu.pipeline_mode<synchronous>, transform_indices = @transform_4, window_bounds = array<i64: 1, 128>}, {transform_indices = @transform_5, window_bounds = array<i64: 16, 128>}]} {
    %c0 = arith.constant 0 : index
    %c0_0 = arith.constant 0 : index
    %0 = vector.load %arg1[%c0, %c0_0] : memref<16x128xbf16, #tpu.memory_space<vmem>>, vector<16x128xbf16>
    %c0_1 = arith.constant 0 : index
    %c0_2 = arith.constant 0 : index
    %1 = vector.load %arg2[%c0_1, %c0_2] : memref<128x128xbf16, #tpu.memory_space<vmem>>, vector<128x128xbf16>
    %cst = arith.constant dense<0.000000e+00> : vector<16x128xf32>
    %2 = tpu.matmul %0, %1, %cst {dimension_numbers = #tpu.dot_dimension_numbers<[1], [0], [0], [1], [0, 0, 1, 1], [], []>} : vector<16x128xbf16>, vector<128x128xbf16>, vector<16x128xf32> -> vector<16x128xf32>
    %c0_3 = arith.constant 0 : index
    %c0_4 = arith.constant 0 : index
    %3 = vector.load %arg3[%c0_3, %c0_4] : memref<1x128xf32, #tpu.memory_space<vmem>>, vector<1x128xf32>
    %4 = vector.broadcast %3 : vector<1x128xf32> to vector<16x128xf32>
    %5 = arith.addf %2, %4 : vector<16x128xf32>
    %cst_5 = arith.constant 5.000000e-01 : f32
    %6 = vector.broadcast %cst_5 : f32 to vector<16x128xf32>
    %7 = arith.mulf %6, %5 : vector<16x128xf32>
    %cst_6 = arith.constant 4.471500e-02 : f32
    %8 = vector.broadcast %cst_6 : f32 to vector<16x128xf32>
    %9 = arith.mulf %8, %5 : vector<16x128xf32>
    %10 = arith.mulf %9, %5 : vector<16x128xf32>
    %11 = arith.mulf %10, %5 : vector<16x128xf32>
    %12 = arith.addf %5, %11 : vector<16x128xf32>
    %cst_7 = arith.constant 0.797884583 : f32
    %13 = vector.broadcast %cst_7 : f32 to vector<16x128xf32>
    %14 = arith.mulf %13, %12 : vector<16x128xf32>
    %15 = math.tanh %14 : vector<16x128xf32>
    %cst_8 = arith.constant 1.000000e+00 : f32
    %16 = vector.broadcast %cst_8 : f32 to vector<16x128xf32>
    %17 = arith.addf %16, %15 : vector<16x128xf32>
    %18 = arith.mulf %7, %17 : vector<16x128xf32>
    %c0_9 = arith.constant 0 : index
    %c0_10 = arith.constant 0 : index
    %19 = vector.load %arg4[%c0_9, %c0_10] : memref<1x128xf32, #tpu.memory_space<vmem>>, vector<1x128xf32>
    %c0_11 = arith.constant 0 : index
    %c0_12 = arith.constant 0 : index
    %20 = vector.load %arg5[%c0_11, %c0_12] : memref<1x128xf32, #tpu.memory_space<vmem>>, vector<1x128xf32>
    %cst_13 = arith.constant dense<0.000000e+00> : vector<16xf32>
    %21 = vector.multi_reduction <add>, %18, %cst_13 [1] : vector<16x128xf32> to vector<16xf32>
    %22 = vector.shape_cast %21 : vector<16xf32> to vector<16x1xf32>
    %cst_14 = arith.constant 1.280000e+02 : f32
    %23 = vector.broadcast %cst_14 : f32 to vector<16x1xf32>
    %24 = arith.divf %22, %23 : vector<16x1xf32>
    %25 = vector.broadcast %24 : vector<16x1xf32> to vector<16x128xf32>
    %26 = arith.subf %18, %25 : vector<16x128xf32>
    %27 = arith.mulf %26, %26 : vector<16x128xf32>
    %cst_15 = arith.constant dense<0.000000e+00> : vector<16xf32>
    %28 = vector.multi_reduction <add>, %27, %cst_15 [1] : vector<16x128xf32> to vector<16xf32>
    %29 = vector.shape_cast %28 : vector<16xf32> to vector<16x1xf32>
    %cst_16 = arith.constant 1.280000e+02 : f32
    %30 = vector.broadcast %cst_16 : f32 to vector<16x1xf32>
    %31 = arith.divf %29, %30 : vector<16x1xf32>
    %32 = vector.broadcast %24 : vector<16x1xf32> to vector<16x128xf32>
    %33 = arith.subf %18, %32 : vector<16x128xf32>
    %cst_17 = arith.constant 9.99999996E-13 : f32
    %34 = vector.broadcast %cst_17 : f32 to vector<16x1xf32>
    %35 = arith.addf %31, %34 : vector<16x1xf32>
    %36 = math.rsqrt %35 : vector<16x1xf32>
    %37 = vector.broadcast %36 : vector<16x1xf32> to vector<16x128xf32>
    %38 = arith.mulf %33, %37 : vector<16x128xf32>
    %39 = vector.broadcast %19 : vector<1x128xf32> to vector<16x128xf32>
    %40 = arith.mulf %38, %39 : vector<16x128xf32>
    %41 = vector.broadcast %20 : vector<1x128xf32> to vector<16x128xf32>
    %42 = arith.addf %40, %41 : vector<16x128xf32>
    %43 = arith.truncf %42 : vector<16x128xf32> to vector<16x128xbf16>
    %c0_18 = arith.constant 0 : index
    %c0_19 = arith.constant 0 : index
    %44 = vector.load %arg6[%c0_18, %c0_19] : memref<16x128xbf16, #tpu.memory_space<vmem>>, vector<16x128xbf16>
    tpu.vector_store %arg6[%c0_18, %c0_19], %43 {strides = array<i32>} : memref<16x128xbf16, #tpu.memory_space<vmem>>, vector<16x128xbf16>,
    return
  }
  func.func @transform_0(%arg0: i32) -> (i32, i32) {
    %c0_i32 = arith.constant 0 : i32
    %c0_i32_0 = arith.constant 0 : i32
    return %arg0, %c0_i32 : i32, i32
  }
  func.func @transform_1(%arg0: i32) -> (i32, i32) {
    %c0_i32 = arith.constant 0 : i32
    %c0_i32_0 = arith.constant 0 : i32
    %c0_i32_1 = arith.constant 0 : i32
    return %c0_i32, %c0_i32_0 : i32, i32
  }
  func.func @transform_2(%arg0: i32) -> (i32, i32) {
    %c0_i32 = arith.constant 0 : i32
    %c0_i32_0 = arith.constant 0 : i32
    %c0_i32_1 = arith.constant 0 : i32
    return %c0_i32, %c0_i32_0 : i32, i32
  }
  func.func @transform_3(%arg0: i32) -> (i32, i32) {
    %c0_i32 = arith.constant 0 : i32
    %c0_i32_0 = arith.constant 0 : i32
    %c0_i32_1 = arith.constant 0 : i32
    return %c0_i32, %c0_i32_0 : i32, i32
  }
  func.func @transform_4(%arg0: i32) -> (i32, i32) {
    %c0_i32 = arith.constant 0 : i32
    %c0_i32_0 = arith.constant 0 : i32
    %c0_i32_1 = arith.constant 0 : i32
    return %c0_i32, %c0_i32_0 : i32, i32
  }
  func.func @transform_5(%arg0: i32) -> (i32, i32) {
    %c0_i32 = arith.constant 0 : i32
    %c0_i32_0 = arith.constant 0 : i32
    return %arg0, %c0_i32 : i32, i32
  }
}

module attributes {stable_mosaic.version = 11 : i64} {
  func.func @mask_lm_kernel(%arg0: i32, %arg1: i32, %arg2: memref<16x128xbf16, #tpu.memory_space<vmem>>, %arg3: memref<128x128xbf16, #tpu.memory_space<vmem>>, %arg4: memref<1x128xf32, #tpu.memory_space<vmem>>, %arg5: memref<16x128xf32, #tpu.memory_space<vmem>>, %arg6: memref<16x1xf32, #tpu.memory_space<vmem>>, %arg7: memref<16x1xf32, #tpu.memory_space<vmem>>, %arg8: memref<16x1xf32, #tpu.memory_space<vmem>>) attributes {dimension_semantics = [#tpu.dimension_semantics<parallel>, #tpu.dimension_semantics<arbitrary>], iteration_bounds = array<i64: 1, 2>, scalar_prefetch = 0 : i64, scratch_operands = 2 : i64, tpu.core_type = #tpu.core_type<tc>, window_params = [{transform_indices = @transform_0, window_bounds = array<i64: 16, 128>}, {transform_indices = @transform_1, window_bounds = array<i64: 128, 128>}, {transform_indices = @transform_2, window_bounds = array<i64: 1, 128>}, {transform_indices = @transform_3, window_bounds = array<i64: 16, 128>}, {transform_indices = @transform_4, window_bounds = array<i64: 16, 1>}]} {
    %c0_i32 = arith.constant 0 : i32
    %0 = arith.cmpi eq, %arg1, %c0_i32 : i32
    %1 = arith.extui %0 : i1 to i32
    %c0_i32_0 = arith.constant 0 : i32
    %2 = arith.cmpi ne, %1, %c0_i32_0 : i32
    scf.if %2 {
      %cst_19 = arith.constant 0xFF800000 : f32
      %29 = vector.broadcast %cst_19 : f32 to vector<16x1xf32>
      %c0_20 = arith.constant 0 : index
      %c0_21 = arith.constant 0 : index
      %30 = vector.load %arg7[%c0_20, %c0_21] : memref<16x1xf32, #tpu.memory_space<vmem>>, vector<16x1xf32>
      tpu.vector_store %arg7[%c0_20, %c0_21], %29 {strides = array<i32>} : memref<16x1xf32, #tpu.memory_space<vmem>>, vector<16x1xf32>,
      %cst_22 = arith.constant 0.000000e+00 : f32
      %31 = vector.broadcast %cst_22 : f32 to vector<16x1xf32>
      %c0_23 = arith.constant 0 : index
      %c0_24 = arith.constant 0 : index
      %32 = vector.load %arg8[%c0_23, %c0_24] : memref<16x1xf32, #tpu.memory_space<vmem>>, vector<16x1xf32>
      tpu.vector_store %arg8[%c0_23, %c0_24], %31 {strides = array<i32>} : memref<16x1xf32, #tpu.memory_space<vmem>>, vector<16x1xf32>,
    } else {
    }
    %c0 = arith.constant 0 : index
    %c0_1 = arith.constant 0 : index
    %3 = vector.load %arg2[%c0, %c0_1] : memref<16x128xbf16, #tpu.memory_space<vmem>>, vector<16x128xbf16>
    %c0_2 = arith.constant 0 : index
    %c0_3 = arith.constant 0 : index
    %4 = vector.load %arg3[%c0_2, %c0_3] : memref<128x128xbf16, #tpu.memory_space<vmem>>, vector<128x128xbf16>
    %cst = arith.constant dense<0.000000e+00> : vector<16x128xf32>
    %5 = tpu.matmul %3, %4, %cst {dimension_numbers = #tpu.dot_dimension_numbers<[1], [0], [0], [1], [0, 0, 1, 1], [], []>} : vector<16x128xbf16>, vector<128x128xbf16>, vector<16x128xf32> -> vector<16x128xf32>
    %c0_4 = arith.constant 0 : index
    %c0_5 = arith.constant 0 : index
    %6 = vector.load %arg4[%c0_4, %c0_5] : memref<1x128xf32, #tpu.memory_space<vmem>>, vector<1x128xf32>
    %7 = vector.broadcast %6 : vector<1x128xf32> to vector<16x128xf32>
    %8 = arith.addf %5, %7 : vector<16x128xf32>
    %c0_6 = arith.constant 0 : index
    %c0_7 = arith.constant 0 : index
    %9 = vector.load %arg5[%c0_6, %c0_7] : memref<16x128xf32, #tpu.memory_space<vmem>>, vector<16x128xf32>
    tpu.vector_store %arg5[%c0_6, %c0_7], %8 {strides = array<i32>} : memref<16x128xf32, #tpu.memory_space<vmem>>, vector<16x128xf32>,
    %c0_8 = arith.constant 0 : index
    %c0_9 = arith.constant 0 : index
    %10 = vector.load %arg7[%c0_8, %c0_9] : memref<16x1xf32, #tpu.memory_space<vmem>>, vector<16x1xf32>
    %cst_10 = arith.constant dense<0xFF800000> : vector<16xf32>
    %11 = vector.multi_reduction <maximumf>, %8, %cst_10 [1] : vector<16x128xf32> to vector<16xf32>
    %12 = vector.shape_cast %11 : vector<16xf32> to vector<16x1xf32>
    %13 = arith.maximumf %10, %12 : vector<16x1xf32>
    %c0_11 = arith.constant 0 : index
    %c0_12 = arith.constant 0 : index
    %14 = vector.load %arg8[%c0_11, %c0_12] : memref<16x1xf32, #tpu.memory_space<vmem>>, vector<16x1xf32>
    %15 = arith.subf %10, %13 : vector<16x1xf32>
    %16 = math.exp %15 : vector<16x1xf32>
    %17 = arith.mulf %14, %16 : vector<16x1xf32>
    %18 = vector.broadcast %13 : vector<16x1xf32> to vector<16x128xf32>
    %19 = arith.subf %8, %18 : vector<16x128xf32>
    %20 = math.exp %19 : vector<16x128xf32>
    %cst_13 = arith.constant dense<0.000000e+00> : vector<16xf32>
    %21 = vector.multi_reduction <add>, %20, %cst_13 [1] : vector<16x128xf32> to vector<16xf32>
    %22 = vector.shape_cast %21 : vector<16xf32> to vector<16x1xf32>
    %23 = arith.addf %17, %22 : vector<16x1xf32>
    %c0_14 = arith.constant 0 : index
    %c0_15 = arith.constant 0 : index
    %24 = vector.load %arg8[%c0_14, %c0_15] : memref<16x1xf32, #tpu.memory_space<vmem>>, vector<16x1xf32>
    tpu.vector_store %arg8[%c0_14, %c0_15], %23 {strides = array<i32>} : memref<16x1xf32, #tpu.memory_space<vmem>>, vector<16x1xf32>,
    %c0_16 = arith.constant 0 : index
    %c0_17 = arith.constant 0 : index
    %25 = vector.load %arg7[%c0_16, %c0_17] : memref<16x1xf32, #tpu.memory_space<vmem>>, vector<16x1xf32>
    tpu.vector_store %arg7[%c0_16, %c0_17], %13 {strides = array<i32>} : memref<16x1xf32, #tpu.memory_space<vmem>>, vector<16x1xf32>,
    %c1_i32 = arith.constant 1 : i32
    %26 = arith.cmpi eq, %arg1, %c1_i32 : i32
    %27 = arith.extui %26 : i1 to i32
    %c0_i32_18 = arith.constant 0 : i32
    %28 = arith.cmpi ne, %27, %c0_i32_18 : i32
    scf.if %28 {
      %c0_19 = arith.constant 0 : index
      %c0_20 = arith.constant 0 : index
      %29 = vector.load %arg7[%c0_19, %c0_20] : memref<16x1xf32, #tpu.memory_space<vmem>>, vector<16x1xf32>
      %c0_21 = arith.constant 0 : index
      %c0_22 = arith.constant 0 : index
      %30 = vector.load %arg8[%c0_21, %c0_22] : memref<16x1xf32, #tpu.memory_space<vmem>>, vector<16x1xf32>
      %31 = math.log %30 : vector<16x1xf32>
      %32 = arith.addf %29, %31 : vector<16x1xf32>
      %c0_23 = arith.constant 0 : index
      %c0_24 = arith.constant 0 : index
      %33 = vector.load %arg6[%c0_23, %c0_24] : memref<16x1xf32, #tpu.memory_space<vmem>>, vector<16x1xf32>
      tpu.vector_store %arg6[%c0_23, %c0_24], %32 {strides = array<i32>} : memref<16x1xf32, #tpu.memory_space<vmem>>, vector<16x1xf32>,
    } else {
    }
    return
  }
  func.func @transform_0(%arg0: i32, %arg1: i32) -> (i32, i32) {
    %c0_i32 = arith.constant 0 : i32
    %c0_i32_0 = arith.constant 0 : i32
    return %arg0, %c0_i32 : i32, i32
  }
  func.func @transform_1(%arg0: i32, %arg1: i32) -> (i32, i32) {
    %c0_i32 = arith.constant 0 : i32
    %c0_i32_0 = arith.constant 0 : i32
    return %c0_i32, %arg1 : i32, i32
  }
  func.func @transform_2(%arg0: i32, %arg1: i32) -> (i32, i32) {
    %c0_i32 = arith.constant 0 : i32
    %c0_i32_0 = arith.constant 0 : i32
    return %c0_i32, %arg1 : i32, i32
  }
  func.func @transform_3(%arg0: i32, %arg1: i32) -> (i32, i32) {
    %c0_i32 = arith.constant 0 : i32
    return %arg0, %arg1 : i32, i32
  }
  func.func @transform_4(%arg0: i32, %arg1: i32) -> (i32, i32) {
    %c0_i32 = arith.constant 0 : i32
    %c0_i32_0 = arith.constant 0 : i32
    return %arg0, %c0_i32 : i32, i32
  }
}

</mosaic_0001>

<llo_original>
// kernel: bert_img_action_sep_pretrain.2
$region0: #{bert_img_action_sep_pretrain.2}
  #allocation0 [shape = 'u32[]', space=smem, size = 0x4, offset = 0x4, fixed_abs, tag = 'smem constant byte address 0x4 - core index']
  #allocation1 [shape = 'u32[144,128]{1,0:T(1,128)}', space=vmem, size = 0x12000, scoped, tag = 'internal scratch']
  %s0 = inlined_call_operand.vmem [shape: bf16[16,128], index: 0, kind: input, shape index: {}]
  %s1 = inlined_call_operand.vmem [shape: bf16[128,128], index: 1, kind: input, shape index: {}]
  %s2 = inlined_call_operand.vmem [shape: f32[1,128], index: 2, kind: input, shape index: {}]
  %s3 = inlined_call_operand.vmem [shape: f32[1,128], index: 3, kind: input, shape index: {}]
  %s4 = inlined_call_operand.vmem [shape: f32[1,128], index: 4, kind: input, shape index: {}]
  %s5 = inlined_call_operand.vmem [shape: bf16[16,128], index: 5, kind: output, shape index: {}]
  %s6 = sld [smem:[#allocation0]]
  $region30: #{bert_img_action_sep_pretrain.2} parent=0
    _
  %s8 = ssub.s32 1, %s6
  %s9 = scalar_select 0, %s8, %s6
  // Predicated region
  $region2: #{bert_img_action_sep_pretrain.2} parent=0 // pred_check
    _
  $region3: #{bert_img_action_sep_pretrain.2} parent=0 // pred_check_branch
    %11 = sbr.rel (0) target = $region5
  $region4: #{bert_img_action_sep_pretrain.2} parent=0 // pred_region
    _
  $region5: #{bert_img_action_sep_pretrain.2} parent=0 // pred_fallthru
    _
  // Predicated region
  $region6: #{bert_img_action_sep_pretrain.2} parent=0 // pred_check
    _
  $region7: #{bert_img_action_sep_pretrain.2} parent=0 // pred_check_branch
    %13 = sbr.rel (0) target = $region9
  $region8: #{bert_img_action_sep_pretrain.2} parent=0 // pred_region
    _
  $region9: #{bert_img_action_sep_pretrain.2} parent=0 // pred_fallthru
    _
  // Predicated region
  $region10: #{bert_img_action_sep_pretrain.2} parent=0 // pred_check
    _
  $region11: #{bert_img_action_sep_pretrain.2} parent=0 // pred_check_branch
    %15 = sbr.rel (0) target = $region13
  $region12: #{bert_img_action_sep_pretrain.2} parent=0 // pred_region
    _
  $region13: #{bert_img_action_sep_pretrain.2} parent=0 // pred_fallthru
    _
  // Predicated region
  $region14: #{bert_img_action_sep_pretrain.2} parent=0 // pred_check
    _
  $region15: #{bert_img_action_sep_pretrain.2} parent=0 // pred_check_branch
    %17 = sbr.rel (0) target = $region17
  $region16: #{bert_img_action_sep_pretrain.2} parent=0 // pred_region
    _
  $region17: #{bert_img_action_sep_pretrain.2} parent=0 // pred_fallthru
    _
  // Predicated region
  $region18: #{bert_img_action_sep_pretrain.2} parent=0 // pred_check
    _
  $region19: #{bert_img_action_sep_pretrain.2} parent=0 // pred_check_branch
    %19 = sbr.rel (0) target = $region21
  $region20: #{bert_img_action_sep_pretrain.2} parent=0 // pred_region
    _
  $region21: #{bert_img_action_sep_pretrain.2} parent=0 // pred_fallthru
    _
  %v21 = vld [vmem:[%s0] sm:$0xf]
  %v22 = vld [vmem:[%s0 + $0x4] sm:$0xf]
  %v23 = vld [vmem:[%s1] sm:$0xf]
  %v24 = vld [vmem:[%s1 + $0x4] sm:$0xf]
  %v25 = vld [vmem:[%s1 + $0x8] sm:$0xf]
  %v26 = vld [vmem:[%s1 + $0xc] sm:$0xf]
  %v27 = vld [vmem:[%s1 + $0x10] sm:$0xf]
  %v28 = vld [vmem:[%s1 + $0x14] sm:$0xf]
  %v29 = vld [vmem:[%s1 + $0x18] sm:$0xf]
  %v30 = vld [vmem:[%s1 + $0x1c] sm:$0xf]
  %v31 = vld [vmem:[%s1 + $0x20] sm:$0xf]
  %v32 = vld [vmem:[%s1 + $0x24] sm:$0xf]
  %v33 = vld [vmem:[%s1 + $0x28] sm:$0xf]
  %v34 = vld [vmem:[%s1 + $0x2c] sm:$0xf]
  %v35 = vld [vmem:[%s1 + $0x30] sm:$0xf]
  %v36 = vld [vmem:[%s1 + $0x34] sm:$0xf]
  %v37 = vld [vmem:[%s1 + $0x38] sm:$0xf]
  %v38 = vld [vmem:[%s1 + $0x3c] sm:$0xf]
  %v39 = vld [vmem:[%s2] sm:$0x1]
  %v41 = vlaneseq
  %v42 = vshrl.u32 %v41, 7
  %v43 = vsub.s32 0, %v42
  %v44 = vrot.slane %v39, %v43
  %v48 = vunpack.c.l.b16 %v21
  %v49 = vunpack.c.l.b16 %v22
  %v50 = vpack.c.b16 %v49, %v48
  %v68 = vunpack.c.l.b16 %v23
  %v69 = vunpack.c.l.b16 %v24
  %v70 = vunpack.c.l.b16 %v25
  %v71 = vunpack.c.l.b16 %v26
  %v72 = vunpack.c.l.b16 %v27
  %v73 = vunpack.c.l.b16 %v28
  %v74 = vunpack.c.l.b16 %v29
  %v75 = vunpack.c.l.b16 %v30
  %v76 = vunpack.c.l.b16 %v31
  %v77 = vunpack.c.l.b16 %v32
  %v78 = vunpack.c.l.b16 %v33
  %v79 = vunpack.c.l.b16 %v34
  %v80 = vunpack.c.l.b16 %v35
  %v81 = vunpack.c.l.b16 %v36
  %v82 = vunpack.c.l.b16 %v37
  %v83 = vunpack.c.l.b16 %v38
  %v84 = vpack.c.b16 %v69, %v68
  %v85 = vpack.c.b16 %v71, %v70
  %v86 = vpack.c.b16 %v73, %v72
  %v87 = vpack.c.b16 %v75, %v74
  %v88 = vpack.c.b16 %v77, %v76
  %v89 = vpack.c.b16 %v79, %v78
  %v90 = vpack.c.b16 %v81, %v80
  %v91 = vpack.c.b16 %v83, %v82
  %100 = vmatprep.subr.bf16.mxu0 0
  %101 = vmatpush1.bf16.msra.mxu0 %v91
  %102 = vmatprep.subr.bf16.mxu0 0
  %103 = vmatpush1.bf16.msra.mxu0 %v90
  %104 = vmatprep.subr.bf16.mxu0 0
  %105 = vmatpush1.bf16.msra.mxu0 %v89
  %106 = vmatprep.subr.bf16.mxu0 0
  %107 = vmatpush1.bf16.msra.mxu0 %v88
  %108 = vmatprep.subr.bf16.mxu0 0
  %109 = vmatpush1.bf16.msra.mxu0 %v87
  %110 = vmatprep.subr.bf16.mxu0 0
  %111 = vmatpush1.bf16.msra.mxu0 %v86
  %112 = vmatprep.subr.bf16.mxu0 0
  %113 = vmatpush1.bf16.msra.mxu0 %v85
  %114 = vmatprep.subr.bf16.mxu0 0
  %115 = vmatpush1.bf16.msra.mxu0 %v84
  %116 = vmatprep.subr.bf16.mxu0 0
  %117 = vmatpush2.bf16.msra.mxu0 0
  %118 = vmatprep.subr.bf16.mxu0 0
  %119 = vmatpush2.bf16.msra.mxu0 0
  %120 = vmatprep.subr.bf16.mxu0 0
  %121 = vmatpush2.bf16.msra.mxu0 0
  %122 = vmatprep.subr.bf16.mxu0 0
  %123 = vmatpush2.bf16.msra.mxu0 0
  %124 = vmatprep.subr.bf16.mxu0 0
  %125 = vmatpush2.bf16.msra.mxu0 0
  %126 = vmatprep.subr.bf16.mxu0 0
  %127 = vmatpush2.bf16.msra.mxu0 0
  %128 = vmatprep.subr.bf16.mxu0 0
  %129 = vmatpush2.bf16.msra.mxu0 0
  %130 = vmatprep.subr.bf16.mxu0 0
  %131 = vmatpush2.bf16.msra.mxu0 0
  %132 = vmatprep.mubr.bf16.mxu0 0
  %133 = vmatmul.mubr.bf16.gmra.mxu0 %v50
  %v134 = vpop.f32.mrf.mxu0
  %v135 = vadd.f32 %v44, %v134
  %v136 = vpop.f32.mrf.mxu0
  %v137 = vpop.f32.mrf.mxu0
  %v138 = vadd.f32 %v44, %v137
  %v139 = vpop.f32.mrf.mxu0
  %140 = vdwg.mxu0
  %v141 = vmul.f32 %v135, 0.5
  %v142 = vmul.f32 %v138, 0.5
  %v143 = vmul.f32 %v135, 0.044715
  %v144 = vmul.f32 %v138, 0.044715
  %v145 = vmul.f32 %v143, %v135
  %v146 = vmul.f32 %v144, %v138
  %v147 = vmul.f32 %v145, %v135
  %v148 = vmul.f32 %v146, %v138
  %v149 = vadd.f32 %v135, %v147
  %v150 = vadd.f32 %v138, %v148
  %v151 = vmul.f32 %v149, 0.7978846
  %v152 = vmul.f32 %v150, 0.7978846
  %v153 = vtanh.pop %v151
  %v154 = vtanh.pop %v152
  %v155 = vadd.f32 %v153, 1.0
  %v156 = vadd.f32 %v154, 1.0
  %v157 = vmul.f32 %v141, %v155
  %v158 = vmul.f32 %v142, %v156
  %v159 = vld [vmem:[%s3] sm:$0x1]
  %v160 = vld [vmem:[%s4] sm:$0x1]
  %161 = vadd.xlane.f32.xlu0 %v157
  %v162 = vpop.xlane.xlu0 %161
  %163 = vadd.xlane.f32.xlu0 %v158
  %v164 = vpop.xlane.xlu0 %163
  %v165 = vrcp.pop 128.0
  %v166 = vmul.f32 %v162, %v165
  %v167 = vmul.f32 %v164, %v165
  %v168 = vsub.f32 %v157, %v166
  %v169 = vsub.f32 %v158, %v167
  %v170 = vmul.f32 %v168, %v168
  %v171 = vmul.f32 %v169, %v169
  %172 = vadd.xlane.f32.xlu0 %v170
  %v173 = vpop.xlane.xlu0 %172
  %174 = vadd.xlane.f32.xlu0 %v171
  %v175 = vpop.xlane.xlu0 %174
  %v176 = vmul.f32 %v173, %v165
  %v177 = vmul.f32 %v175, %v165
  %v178 = vadd.f32 %v176, 1e-12
  %v179 = vadd.f32 %v177, 1e-12
  %v180 = vrsqrt.pop %v178
  %v181 = vrsqrt.pop %v179
  %v182 = vmul.f32 %v168, %v180
  %v183 = vmul.f32 %v169, %v181
  %v185 = vlaneseq
  %v186 = vshrl.u32 %v185, 7
  %v187 = vsub.s32 0, %v186
  %v188 = vrot.slane %v159, %v187
  %v190 = vmul.f32 %v182, %v188
  %v191 = vmul.f32 %v183, %v188
  %v193 = vlaneseq
  %v194 = vshrl.u32 %v193, 7
  %v195 = vsub.s32 0, %v194
  %v196 = vrot.slane %v160, %v195
  %v198 = vadd.f32 %v190, %v196
  %v199 = vadd.f32 %v191, %v196
  %v200 = vpack.c.bf16 %v199, %v198
  %v202 = vunpack.c.l.b16 %v200
  %v203 = vunpack.c.h.b16 %v200
  %v204 = vpack.c.b16 %v202, %v202
  %v205 = vpack.c.b16 %v203, %v203
  %208 = vst [vmem:[%s5] sm:$0xf] %v204
  %209 = vst [vmem:[%s5 + $0x4] sm:$0xf] %v205
  // Predicated region
  $region22: #{bert_img_action_sep_pretrain.2} parent=0 // pred_check
    _
  $region23: #{bert_img_action_sep_pretrain.2} parent=0 // pred_check_branch
    %211 = sbr.rel (0) target = $region25
  $region24: #{bert_img_action_sep_pretrain.2} parent=0 // pred_region
    _
  $region25: #{bert_img_action_sep_pretrain.2} parent=0 // pred_fallthru
    _
  // Predicated region
  $region26: #{bert_img_action_sep_pretrain.2} parent=0 // pred_check
    _
  $region27: #{bert_img_action_sep_pretrain.2} parent=0 // pred_check_branch
    %213 = sbr.rel (0) target = $region29
  $region28: #{bert_img_action_sep_pretrain.2} parent=0 // pred_region
    _
  $region29: #{bert_img_action_sep_pretrain.2} parent=0 // pred_fallthru
    _

// kernel: bert_img_action_sep_pretrain.3
$region0: #{bert_img_action_sep_pretrain.3}
  #allocation0 [shape = 'u32[]', space=smem, size = 0x4, offset = 0x4, fixed_abs, tag = 'smem constant byte address 0x4 - core index']
  #allocation1 [shape = 'u32[144,128]{1,0:T(1,128)}', space=vmem, size = 0x12000, scoped, tag = 'internal scratch']
  #allocation2 [shape = 'f32[16,1]{1,0:T(8,128)}', space=vmem, size = 0x2000, scoped, tag = 'scratch operand']
  #allocation3 [shape = 'f32[16,1]{1,0:T(8,128)}', space=vmem, size = 0x2000, scoped, tag = 'scratch operand']
  %s0 = inlined_call_operand.vmem [shape: bf16[16,128], index: 0, kind: input, shape index: {}]
  %s1 = inlined_call_operand.vmem [shape: bf16[128,256], index: 1, kind: input, shape index: {}]
  %s2 = inlined_call_operand.vmem [shape: f32[1,256], index: 2, kind: input, shape index: {}]
  %s3 = inlined_call_operand.vmem [shape: f32[16,256], index: 3, kind: output, shape index: {0}]
  %s4 = inlined_call_operand.vmem [shape: f32[16,1], index: 4, kind: output, shape index: {1}]
  %5 = xla_tuple %s3, %s4
  %s6 = sld [smem:[#allocation0]]
  $region136: #{bert_img_action_sep_pretrain.3} parent=0
    _
  %s8 = ssub.s32 1, %s6
  %s9 = scalar_select 0, %s8, %s6
  $region1: #{bert_img_action_sep_pretrain.3} parent=0
    #allocation4 [shape = 'u8[65536]{0}', space=vmem, size = 0x10000, scoped, tag = 'input window, operand 1']
    #allocation5 [shape = 'u8[16384]{0}', space=vmem, size = 0x4000, scoped, tag = 'output window, operand 0']
    loop: start=0, step=1, limit=4
    $region2: #{bert_img_action_sep_pretrain.3} parent=1 // loop_pre_header
      _
    $region3: #{bert_img_action_sep_pretrain.3} parent=1 // loop_header
      %s11 = sphi 0, %s15
      %p12 = scmp.ge.s32.totalorder %s11, 4
      %s18 = sphi 0, %s30
      %s19 = sphi 0, %s26
      %s20 = sphi 0, %s18
      %s21 = sphi 0, %s19
      %s22 = sphi 0, %s20
      %s23 = sphi 0, %s21
      %s33 = sphi 0, %s35
      %s36 = sphi 0, %s33
      %s37 = sphi 0, %s36
      %s53 = sphi 0, %s37
      %s59 = sphi 0, %s61
      %s62 = sphi 0, %s59
      %s63 = sphi 0, %s62
      %s79 = sphi 0, %s63
      %s85 = sphi 0, %s87
      %s88 = sphi 0, %s85
      %s89 = sphi 0, %s88
      %s105 = sphi 0, %s89
      %s113 = sphi 0, %s115
      %s116 = sphi 0, %s113
      %s117 = sphi 0, %s116
      %s133 = sphi 0, %s117
      %s139 = sphi 0, %s141
      %s142 = sphi 0, %s139
      %s143 = sphi 0, %s142
      %s159 = sphi 0, %s143
    $region4: #{bert_img_action_sep_pretrain.3} parent=1 // loop_header_branch
      %14 = sbr.rel (%p12) target = $region8
    $region5: #{bert_img_action_sep_pretrain.3} parent=1 // loop_body
      %s16 = ssub.s32 %s11, 1
      %s17 = ssub.s32 %s11, 2
      %s24 = sadd.s32 1, %s19
      %p25 = scmp.ge.s32.totalorder %s24, 2
      %s26 = scalar_select %p25, 0, %s24
      %s27 = sadd.s32 1, %s18
      %s28 = scalar_select %p25, %s27, %s18
      %p29 = scmp.ge.s32.totalorder %s28, 1
      %s30 = scalar_select %p29, 0, %s28
      %s31 = ssub.s32 %s18, %s30
      %p32 = scmp.eq.s32.totalorder %s31, 0
      %s34 = sadd.s32 %s33, 1
      %s35 = scalar_select %p32, %s33, %s34
      %p38 = pneg %p32
      %p39 = scmp.eq.s32.totalorder %s11, 1
      %p40 = por %p38, %p39
      %p41 = scmp.ne.s32.totalorder %s33, %s36
      %p42 = scmp.eq.s32.totalorder %s11, 0
      %p43 = por %p41, %p42
      %p44 = scmp.ne.s32.totalorder %s33, %s36
      %p45 = scmp.eq.s32.totalorder %s16, 1
      %p46 = por %p44, %p45
      %p47 = scmp.ne.s32.totalorder %s36, %s37
      %p48 = scmp.eq.s32.totalorder %s16, 0
      %p49 = por %p47, %p48
      %p50 = scmp.ne.s32.totalorder %s36, %s37
      %p51 = scmp.eq.s32.totalorder %s17, 1
      %p52 = por %p50, %p51
      %p54 = scmp.ne.s32.totalorder %s37, %s53
      %p55 = scmp.eq.s32.totalorder %s17, 0
      %p56 = por %p54, %p55
      %s57 = ssub.s32 %s19, %s26
      %p58 = scmp.eq.s32.totalorder %s57, 0
      %s60 = sadd.s32 %s59, 1
      %s61 = scalar_select %p58, %s59, %s60
      %p64 = pneg %p58
      %p65 = scmp.eq.s32.totalorder %s11, 1
      %p66 = por %p64, %p65
      %p67 = scmp.ne.s32.totalorder %s59, %s62
      %p68 = scmp.eq.s32.totalorder %s11, 0
      %p69 = por %p67, %p68
      %p70 = scmp.ne.s32.totalorder %s59, %s62
      %p71 = scmp.eq.s32.totalorder %s16, 1
      %p72 = por %p70, %p71
      %p73 = scmp.ne.s32.totalorder %s62, %s63
      %p74 = scmp.eq.s32.totalorder %s16, 0
      %p75 = por %p73, %p74
      %p76 = scmp.ne.s32.totalorder %s62, %s63
      %p77 = scmp.eq.s32.totalorder %s17, 1
      %p78 = por %p76, %p77
      %p80 = scmp.ne.s32.totalorder %s63, %s79
      %p81 = scmp.eq.s32.totalorder %s17, 0
      %p82 = por %p80, %p81
      %s83 = ssub.s32 %s19, %s26
      %p84 = scmp.eq.s32.totalorder %s83, 0
      %s86 = sadd.s32 %s85, 1
      %s87 = scalar_select %p84, %s85, %s86
      %p90 = pneg %p84
      %p91 = scmp.eq.s32.totalorder %s11, 1
      %p92 = por %p90, %p91
      %p93 = scmp.ne.s32.totalorder %s85, %s88
      %p94 = scmp.eq.s32.totalorder %s11, 0
      %p95 = por %p93, %p94
      %p96 = scmp.ne.s32.totalorder %s85, %s88
      %p97 = scmp.eq.s32.totalorder %s16, 1
      %p98 = por %p96, %p97
      %p99 = scmp.ne.s32.totalorder %s88, %s89
      %p100 = scmp.eq.s32.totalorder %s16, 0
      %p101 = por %p99, %p100
      %p102 = scmp.ne.s32.totalorder %s88, %s89
      %p103 = scmp.eq.s32.totalorder %s17, 1
      %p104 = por %p102, %p103
      %p106 = scmp.ne.s32.totalorder %s89, %s105
      %p107 = scmp.eq.s32.totalorder %s17, 0
      %p108 = por %p106, %p107
      %s109 = ssub.s32 %s18, %s30
      %s110 = ssub.s32 %s19, %s26
      %s111 = sor.u32 %s109, %s110
      %p112 = scmp.eq.s32.totalorder %s111, 0
      %s114 = sadd.s32 %s113, 1
      %s115 = scalar_select %p112, %s113, %s114
      %p118 = pneg %p112
      %p119 = scmp.eq.s32.totalorder %s11, 1
      %p120 = por %p118, %p119
      %p121 = scmp.ne.s32.totalorder %s113, %s116
      %p122 = scmp.eq.s32.totalorder %s11, 0
      %p123 = por %p121, %p122
      %p124 = scmp.ne.s32.totalorder %s113, %s116
      %p125 = scmp.eq.s32.totalorder %s16, 1
      %p126 = por %p124, %p125
      %p127 = scmp.ne.s32.totalorder %s116, %s117
      %p128 = scmp.eq.s32.totalorder %s16, 0
      %p129 = por %p127, %p128
      %p130 = scmp.ne.s32.totalorder %s116, %s117
      %p131 = scmp.eq.s32.totalorder %s17, 1
      %p132 = por %p130, %p131
      %p134 = scmp.ne.s32.totalorder %s117, %s133
      %p135 = scmp.eq.s32.totalorder %s17, 0
      %p136 = por %p134, %p135
      %s137 = ssub.s32 %s18, %s30
      %p138 = scmp.eq.s32.totalorder %s137, 0
      %s140 = sadd.s32 %s139, 1
      %s141 = scalar_select %p138, %s139, %s140
      %p144 = pneg %p138
      %p145 = scmp.eq.s32.totalorder %s11, 1
      %p146 = por %p144, %p145
      %p147 = scmp.ne.s32.totalorder %s139, %s142
      %p148 = scmp.eq.s32.totalorder %s11, 0
      %p149 = por %p147, %p148
      %p150 = scmp.ne.s32.totalorder %s139, %s142
      %p151 = scmp.eq.s32.totalorder %s16, 1
      %p152 = por %p150, %p151
      %p153 = scmp.ne.s32.totalorder %s142, %s143
      %p154 = scmp.eq.s32.totalorder %s16, 0
      %p155 = por %p153, %p154
      %p156 = scmp.ne.s32.totalorder %s142, %s143
      %p157 = scmp.eq.s32.totalorder %s17, 1
      %p158 = por %p156, %p157
      %p160 = scmp.ne.s32.totalorder %s143, %s159
      %p161 = scmp.eq.s32.totalorder %s17, 0
      %p162 = por %p160, %p161
      %p163 = scmp.le.s32.totalorder 1, %s11
      %p164 = scmp.lt.s32.totalorder %s11, 3
      %p165 = pnand %p163, %p164
      %p166 = pneg %p165
      // Predicated region
      $region9: #{bert_img_action_sep_pretrain.3} parent=5 // pred_check
        _
      $region10: #{bert_img_action_sep_pretrain.3} parent=5 // pred_check_branch
        %168 = sbr.rel (%p165) target = $region12
      $region11: #{bert_img_action_sep_pretrain.3} parent=5 // pred_region
        %s169 = ssub.s32 %s11, 1
        // Predicated region
        $region13: #{bert_img_action_sep_pretrain.3} parent=11 // pred_check
          %p170 = pneg %p49
        $region14: #{bert_img_action_sep_pretrain.3} parent=11 // pred_check_branch
          %172 = sbr.rel (%p170) target = $region16
        $region15: #{bert_img_action_sep_pretrain.3} parent=11 // pred_region
          %s173 = smul.u32 2, %s20
          %p174 = scmp.lt.s32.totalorder %s173, 1
          %s175 = scalar_select %p174, %s173, 1
          %s176 = smul.addr %s175, 4
          %s177 = scalar_lea.vmem %s0, %s176
          %s178 = smul.u32 2, %s20
        $region16: #{bert_img_action_sep_pretrain.3} parent=11 // pred_fallthru
          _
      $region12: #{bert_img_action_sep_pretrain.3} parent=5 // pred_fallthru
        _
      %p179 = scmp.lt.s32.totalorder %s11, 2
      // Predicated region
      $region17: #{bert_img_action_sep_pretrain.3} parent=5 // pred_check
        %p180 = pneg %p179
      $region18: #{bert_img_action_sep_pretrain.3} parent=5 // pred_check_branch
        %182 = sbr.rel (%p180) target = $region20
      $region19: #{bert_img_action_sep_pretrain.3} parent=5 // pred_region
        // Predicated region
        $region21: #{bert_img_action_sep_pretrain.3} parent=19 // pred_check
          %p183 = pneg %p69
        $region22: #{bert_img_action_sep_pretrain.3} parent=19 // pred_check_branch
          %185 = sbr.rel (%p183) target = $region24
        $region23: #{bert_img_action_sep_pretrain.3} parent=19 // pred_region
          %s186 = sand.u32 %s59, 1
          %s187 = sand.u32 %s59, 1
          %s188 = smul.addr %s187, 64
          %s189 = scalar_lea.vmem [#allocation4], %s188
          %s190 = smul.addr %s19, 4
          %s191 = scalar_lea.vmem %s1, %s190
          // Predicated region
          $region25: #{bert_img_action_sep_pretrain.3} parent=23 // pred_check
            _
          $region26: #{bert_img_action_sep_pretrain.3} parent=23 // pred_check_branch
            %193 = sbr.rel (0) target = $region28
          $region27: #{bert_img_action_sep_pretrain.3} parent=23 // pred_region
            // Predicated region
            $region29: #{bert_img_action_sep_pretrain.3} parent=27 // pred_check
              _
            $region30: #{bert_img_action_sep_pretrain.3} parent=27 // pred_check_branch
              %195 = sbr.rel target = $region32
            $region31: #{bert_img_action_sep_pretrain.3} parent=27 // pred_region
              // Predicated region
              $region44: #{bert_img_action_sep_pretrain.3} parent=31 // pred_check
                _
              $region45: #{bert_img_action_sep_pretrain.3} parent=31 // pred_check_branch
                %241 = sbr.rel (0) target = $region47
              $region46: #{bert_img_action_sep_pretrain.3} parent=31 // pred_region
                loop: start=0, step=1, limit=1
                $region48: #{bert_img_action_sep_pretrain.3} parent=46 // loop_pre_header
                  _
                $region49: #{bert_img_action_sep_pretrain.3} parent=46 // loop_header
                  %s243 = sphi 0, %s247
                  %p244 = scmp.ge.s32.totalorder %s243, 1
                  %s248 = sphi %s191, %s191
                  %s249 = sphi %s189, %s189
                $region50: #{bert_img_action_sep_pretrain.3} parent=46 // loop_header_branch
                  %246 = sbr.rel (%p244) target = $region54
                $region51: #{bert_img_action_sep_pretrain.3} parent=46 // loop_body
                  _
                $region52: #{bert_img_action_sep_pretrain.3} parent=46 // loop_footer
                  %s247 = sadd.s32 1, %s243
                $region53: #{bert_img_action_sep_pretrain.3} parent=46 // loop_footer_branch
                  %242 = sbr.rel target = $region49
                $region54: #{bert_img_action_sep_pretrain.3} parent=46 // loop_exit
                  _
                %s251 = ssub.s32 16, 1
                loop: start=0, step=1, limit=1
                $region55: #{bert_img_action_sep_pretrain.3} parent=46 // loop_pre_header
                  _
                $region56: #{bert_img_action_sep_pretrain.3} parent=46 // loop_header
                  %s253 = sphi 0, %s257
                  %p254 = scmp.ge.s32.totalorder %s253, 1
                  %s258 = sphi %s191, %s191
                  %s259 = sphi %s189, %s189
                $region57: #{bert_img_action_sep_pretrain.3} parent=46 // loop_header_branch
                  %256 = sbr.rel (%p254) target = $region61
                $region58: #{bert_img_action_sep_pretrain.3} parent=46 // loop_body
                  %v260 = vld [vmem:[%s258] sm:%s251]
                  %261 = vst [vmem:[%s259] sm:%s251] %v260
                  %v262 = vld [vmem:[%s258 + $0x8] sm:%s251]
                  %263 = vst [vmem:[%s259 + $0x4] sm:%s251] %v262
                  %v264 = vld [vmem:[%s258 + $0x10] sm:%s251]
                  %265 = vst [vmem:[%s259 + $0x8] sm:%s251] %v264
                  %v266 = vld [vmem:[%s258 + $0x18] sm:%s251]
                  %267 = vst [vmem:[%s259 + $0xc] sm:%s251] %v266
                  %v268 = vld [vmem:[%s258 + $0x20] sm:%s251]
                  %269 = vst [vmem:[%s259 + $0x10] sm:%s251] %v268
                  %v270 = vld [vmem:[%s258 + $0x28] sm:%s251]
                  %271 = vst [vmem:[%s259 + $0x14] sm:%s251] %v270
                  %v272 = vld [vmem:[%s258 + $0x30] sm:%s251]
                  %273 = vst [vmem:[%s259 + $0x18] sm:%s251] %v272
                  %v274 = vld [vmem:[%s258 + $0x38] sm:%s251]
                  %275 = vst [vmem:[%s259 + $0x1c] sm:%s251] %v274
                  %v276 = vld [vmem:[%s258 + $0x40] sm:%s251]
                  %277 = vst [vmem:[%s259 + $0x20] sm:%s251] %v276
                  %v278 = vld [vmem:[%s258 + $0x48] sm:%s251]
                  %279 = vst [vmem:[%s259 + $0x24] sm:%s251] %v278
                  %v280 = vld [vmem:[%s258 + $0x50] sm:%s251]
                  %281 = vst [vmem:[%s259 + $0x28] sm:%s251] %v280
                  %v282 = vld [vmem:[%s258 + $0x58] sm:%s251]
                  %283 = vst [vmem:[%s259 + $0x2c] sm:%s251] %v282
                  %v284 = vld [vmem:[%s258 + $0x60] sm:%s251]
                  %285 = vst [vmem:[%s259 + $0x30] sm:%s251] %v284
                  %v286 = vld [vmem:[%s258 + $0x68] sm:%s251]
                  %287 = vst [vmem:[%s259 + $0x34] sm:%s251] %v286
                  %v288 = vld [vmem:[%s258 + $0x70] sm:%s251]
                  %289 = vst [vmem:[%s259 + $0x38] sm:%s251] %v288
                  %v290 = vld [vmem:[%s258 + $0x78] sm:%s251]
                  %291 = vst [vmem:[%s259 + $0x3c] sm:%s251] %v290
                $region59: #{bert_img_action_sep_pretrain.3} parent=46 // loop_footer
                  %s257 = sadd.s32 1, %s253
                $region60: #{bert_img_action_sep_pretrain.3} parent=46 // loop_footer_branch
                  %252 = sbr.rel target = $region56
                $region61: #{bert_img_action_sep_pretrain.3} parent=46 // loop_exit
                  _
              $region47: #{bert_img_action_sep_pretrain.3} parent=31 // pred_fallthru
                _
            $region32: #{bert_img_action_sep_pretrain.3} parent=27 // pred_fallthru
              _
            // Predicated region
            $region33: #{bert_img_action_sep_pretrain.3} parent=27 // pred_check
              _
            $region34: #{bert_img_action_sep_pretrain.3} parent=27 // pred_check_branch
              %197 = sbr.rel (0) target = $region36
            $region35: #{bert_img_action_sep_pretrain.3} parent=27 // pred_region
              %s199 = ssub.s32 16, 1
              loop: start=0, step=1, limit=1
              $region37: #{bert_img_action_sep_pretrain.3} parent=35 // loop_pre_header
                _
              $region38: #{bert_img_action_sep_pretrain.3} parent=35 // loop_header
                %s201 = sphi 0, %s205
                %p202 = scmp.ge.s32.totalorder %s201, 1
                %s206 = sphi %s191, %s191
                %s207 = sphi %s189, %s189
              $region39: #{bert_img_action_sep_pretrain.3} parent=35 // loop_header_branch
                %204 = sbr.rel (%p202) target = $region43
              $region40: #{bert_img_action_sep_pretrain.3} parent=35 // loop_body
                %v208 = vld [vmem:[%s206] sm:%s199]
                %209 = vst [vmem:[%s207] sm:%s199] %v208
                %v210 = vld [vmem:[%s206 + $0x8] sm:%s199]
                %211 = vst [vmem:[%s207 + $0x4] sm:%s199] %v210
                %v212 = vld [vmem:[%s206 + $0x10] sm:%s199]
                %213 = vst [vmem:[%s207 + $0x8] sm:%s199] %v212
                %v214 = vld [vmem:[%s206 + $0x18] sm:%s199]
                %215 = vst [vmem:[%s207 + $0xc] sm:%s199] %v214
                %v216 = vld [vmem:[%s206 + $0x20] sm:%s199]
                %217 = vst [vmem:[%s207 + $0x10] sm:%s199] %v216
                %v218 = vld [vmem:[%s206 + $0x28] sm:%s199]
                %219 = vst [vmem:[%s207 + $0x14] sm:%s199] %v218
                %v220 = vld [vmem:[%s206 + $0x30] sm:%s199]
                %221 = vst [vmem:[%s207 + $0x18] sm:%s199] %v220
                %v222 = vld [vmem:[%s206 + $0x38] sm:%s199]
                %223 = vst [vmem:[%s207 + $0x1c] sm:%s199] %v222
                %v224 = vld [vmem:[%s206 + $0x40] sm:%s199]
                %225 = vst [vmem:[%s207 + $0x20] sm:%s199] %v224
                %v226 = vld [vmem:[%s206 + $0x48] sm:%s199]
                %227 = vst [vmem:[%s207 + $0x24] sm:%s199] %v226
                %v228 = vld [vmem:[%s206 + $0x50] sm:%s199]
                %229 = vst [vmem:[%s207 + $0x28] sm:%s199] %v228
                %v230 = vld [vmem:[%s206 + $0x58] sm:%s199]
                %231 = vst [vmem:[%s207 + $0x2c] sm:%s199] %v230
                %v232 = vld [vmem:[%s206 + $0x60] sm:%s199]
                %233 = vst [vmem:[%s207 + $0x30] sm:%s199] %v232
                %v234 = vld [vmem:[%s206 + $0x68] sm:%s199]
                %235 = vst [vmem:[%s207 + $0x34] sm:%s199] %v234
                %v236 = vld [vmem:[%s206 + $0x70] sm:%s199]
                %237 = vst [vmem:[%s207 + $0x38] sm:%s199] %v236
                %v238 = vld [vmem:[%s206 + $0x78] sm:%s199]
                %239 = vst [vmem:[%s207 + $0x3c] sm:%s199] %v238
              $region41: #{bert_img_action_sep_pretrain.3} parent=35 // loop_footer
                %s205 = sadd.s32 1, %s201
              $region42: #{bert_img_action_sep_pretrain.3} parent=35 // loop_footer_branch
                %200 = sbr.rel target = $region38
              $region43: #{bert_img_action_sep_pretrain.3} parent=35 // loop_exit
                _
            $region36: #{bert_img_action_sep_pretrain.3} parent=27 // pred_fallthru
              _
          $region28: #{bert_img_action_sep_pretrain.3} parent=23 // pred_fallthru
            _
          %292 = vnop
        $region24: #{bert_img_action_sep_pretrain.3} parent=19 // pred_fallthru
          _
        // Predicated region
        $region62: #{bert_img_action_sep_pretrain.3} parent=19 // pred_check
          %p293 = pneg %p95
        $region63: #{bert_img_action_sep_pretrain.3} parent=19 // pred_check_branch
          %295 = sbr.rel (%p293) target = $region65
        $region64: #{bert_img_action_sep_pretrain.3} parent=19 // pred_region
          %p296 = scmp.lt.s32.totalorder %s19, 1
          %s297 = scalar_select %p296, %s19, 1
          %s298 = scalar_lea.vmem %s2, %s297
        $region65: #{bert_img_action_sep_pretrain.3} parent=19 // pred_fallthru
          _
      $region20: #{bert_img_action_sep_pretrain.3} parent=5 // pred_fallthru
        _
      %p299 = scmp.le.s32.totalorder 1, %s11
      %p300 = scmp.lt.s32.totalorder %s11, 3
      %p301 = pnand %p299, %p300
      %p302 = pneg %p301
      // Predicated region
      $region66: #{bert_img_action_sep_pretrain.3} parent=5 // pred_check
        _
      $region67: #{bert_img_action_sep_pretrain.3} parent=5 // pred_check_branch
        %304 = sbr.rel (%p301) target = $region69
      $region68: #{bert_img_action_sep_pretrain.3} parent=5 // pred_region
        %s305 = ssub.s32 %s11, 1
        %s306 = sand.u32 %s62, 1
        %s307 = sand.u32 %s62, 1
        %s308 = smul.addr %s307, 64
        %s309 = scalar_lea.vmem [#allocation4], %s308
        // Predicated region
        $region70: #{bert_img_action_sep_pretrain.3} parent=68 // pred_check
          %p310 = pneg %p75
        $region71: #{bert_img_action_sep_pretrain.3} parent=68 // pred_check_branch
          %312 = sbr.rel (%p310) target = $region73
        $region72: #{bert_img_action_sep_pretrain.3} parent=68 // pred_region
          _
        $region73: #{bert_img_action_sep_pretrain.3} parent=68 // pred_fallthru
          _
        %s313 = smul.u32 2, %s20
        %p314 = scmp.lt.s32.totalorder %s313, 1
        %s315 = scalar_select %p314, %s313, 1
        %s316 = smul.addr %s315, 4
        %s317 = scalar_lea.vmem %s0, %s316
        %p318 = pneg %p49
        %p319 = pneg %p46
        %s320 = sand.u32 %s62, 1
        %s321 = sand.u32 %s62, 1
        %s322 = smul.addr %s321, 64
        %s323 = scalar_lea.vmem [#allocation4], %s322
        %p324 = pneg %p75
        %p325 = pneg %p72
        %p326 = scmp.lt.s32.totalorder %s21, 1
        %s327 = scalar_select %p326, %s21, 1
        %s328 = scalar_lea.vmem %s2, %s327
        %p329 = pneg %p101
        %p330 = pneg %p98
        %p331 = pneg %p129
        %p332 = pneg %p126
        %s333 = sand.u32 %s116, 1
        %s334 = sand.u32 %s116, 1
        %s335 = smul.addr %s334, 16
        %s336 = scalar_lea.vmem [#allocation5], %s335
        %p337 = pneg %p155
        %p338 = pneg %p152
        %s339 = smul.u32 2, %s20
        %p340 = scmp.lt.s32.totalorder %s339, 1
        %s341 = scalar_select %p340, %s339, 1
        %s342 = smul.addr %s341, 8
        %s343 = scalar_lea.vmem %s4, %s342
        %s344 = smul.u32 2, %s20
        %p345 = scmp.lt.s32.totalorder %s344, 1
        %s346 = scalar_select %p345, %s344, 1
        %s347 = smul.addr %s346, 4
        %s348 = scalar_lea.vmem %s0, %s347
        %s349 = smul.u32 2, %s20
        %p350 = scmp.lt.s32.totalorder %s21, 1
        %s351 = scalar_select %p350, %s21, 1
        %s352 = scalar_lea.vmem %s2, %s351
        %s353 = smul.u32 2, %s20
        %s354 = smul.u32 2, %s20
        %p355 = scmp.lt.s32.totalorder %s354, 1
        %s356 = scalar_select %p355, %s354, 1
        %s357 = smul.addr %s356, 8
        %s358 = scalar_lea.vmem %s4, %s357
        %s359 = smul.u32 2, %s20
        %p361 = scmp.eq.s32.totalorder %s21, 0
        // Predicated region
        $region74: #{bert_img_action_sep_pretrain.3} parent=68 // pred_check
          %p362 = pneg %p361
        $region75: #{bert_img_action_sep_pretrain.3} parent=68 // pred_check_branch
          %364 = sbr.rel (%p362) target = $region77
        $region76: #{bert_img_action_sep_pretrain.3} parent=68 // pred_region
          %vm365 = vcmask 7168
          %366 = vst.msk [vmem:[#allocation2] sm:$0xff] %vm365, -inf
          %367 = vst.msk [vmem:[#allocation2 + $0x8] sm:$0xff] %vm365, -inf
          %368 = vst.msk [vmem:[#allocation3] sm:$0xff] %vm365, 0.0
          %369 = vst.msk [vmem:[#allocation3 + $0x8] sm:$0xff] %vm365, 0.0
        $region77: #{bert_img_action_sep_pretrain.3} parent=68 // pred_fallthru
          _
        %v370 = vld [vmem:[%s348] sm:$0xf]
        %v371 = vld [vmem:[%s348 + $0x4] sm:$0xf]
        %v372 = vld [vmem:[%s309] sm:$0xf]
        %v373 = vld [vmem:[%s309 + $0x4] sm:$0xf]
        %v374 = vld [vmem:[%s309 + $0x8] sm:$0xf]
        %v375 = vld [vmem:[%s309 + $0xc] sm:$0xf]
        %v376 = vld [vmem:[%s309 + $0x10] sm:$0xf]
        %v377 = vld [vmem:[%s309 + $0x14] sm:$0xf]
        %v378 = vld [vmem:[%s309 + $0x18] sm:$0xf]
        %v379 = vld [vmem:[%s309 + $0x1c] sm:$0xf]
        %v380 = vld [vmem:[%s309 + $0x20] sm:$0xf]
        %v381 = vld [vmem:[%s309 + $0x24] sm:$0xf]
        %v382 = vld [vmem:[%s309 + $0x28] sm:$0xf]
        %v383 = vld [vmem:[%s309 + $0x2c] sm:$0xf]
        %v384 = vld [vmem:[%s309 + $0x30] sm:$0xf]
        %v385 = vld [vmem:[%s309 + $0x34] sm:$0xf]
        %v386 = vld [vmem:[%s309 + $0x38] sm:$0xf]
        %v387 = vld [vmem:[%s309 + $0x3c] sm:$0xf]
        %v388 = vld [vmem:[%s352] sm:$0x1]
        %v390 = vlaneseq
        %v391 = vshrl.u32 %v390, 7
        %v392 = vsub.s32 0, %v391
        %v393 = vrot.slane %v388, %v392
        %v397 = vunpack.c.l.b16 %v370
        %v398 = vunpack.c.l.b16 %v371
        %v399 = vpack.c.b16 %v398, %v397
        %v417 = vunpack.c.l.b16 %v372
        %v418 = vunpack.c.l.b16 %v373
        %v419 = vunpack.c.l.b16 %v374
        %v420 = vunpack.c.l.b16 %v375
        %v421 = vunpack.c.l.b16 %v376
        %v422 = vunpack.c.l.b16 %v377
        %v423 = vunpack.c.l.b16 %v378
        %v424 = vunpack.c.l.b16 %v379
        %v425 = vunpack.c.l.b16 %v380
        %v426 = vunpack.c.l.b16 %v381
        %v427 = vunpack.c.l.b16 %v382
        %v428 = vunpack.c.l.b16 %v383
        %v429 = vunpack.c.l.b16 %v384
        %v430 = vunpack.c.l.b16 %v385
        %v431 = vunpack.c.l.b16 %v386
        %v432 = vunpack.c.l.b16 %v387
        %v433 = vpack.c.b16 %v418, %v417
        %v434 = vpack.c.b16 %v420, %v419
        %v435 = vpack.c.b16 %v422, %v421
        %v436 = vpack.c.b16 %v424, %v423
        %v437 = vpack.c.b16 %v426, %v425
        %v438 = vpack.c.b16 %v428, %v427
        %v439 = vpack.c.b16 %v430, %v429
        %v440 = vpack.c.b16 %v432, %v431
        %449 = vmatprep.subr.bf16.mxu0 0
        %450 = vmatpush1.bf16.msra.mxu0 %v440
        %451 = vmatprep.subr.bf16.mxu0 0
        %452 = vmatpush1.bf16.msra.mxu0 %v439
        %453 = vmatprep.subr.bf16.mxu0 0
        %454 = vmatpush1.bf16.msra.mxu0 %v438
        %455 = vmatprep.subr.bf16.mxu0 0
        %456 = vmatpush1.bf16.msra.mxu0 %v437
        %457 = vmatprep.subr.bf16.mxu0 0
        %458 = vmatpush1.bf16.msra.mxu0 %v436
        %459 = vmatprep.subr.bf16.mxu0 0
        %460 = vmatpush1.bf16.msra.mxu0 %v435
        %461 = vmatprep.subr.bf16.mxu0 0
        %462 = vmatpush1.bf16.msra.mxu0 %v434
        %463 = vmatprep.subr.bf16.mxu0 0
        %464 = vmatpush1.bf16.msra.mxu0 %v433
        %465 = vmatprep.subr.bf16.mxu0 0
        %466 = vmatpush2.bf16.msra.mxu0 0
        %467 = vmatprep.subr.bf16.mxu0 0
        %468 = vmatpush2.bf16.msra.mxu0 0
        %469 = vmatprep.subr.bf16.mxu0 0
        %470 = vmatpush2.bf16.msra.mxu0 0
        %471 = vmatprep.subr.bf16.mxu0 0
        %472 = vmatpush2.bf16.msra.mxu0 0
        %473 = vmatprep.subr.bf16.mxu0 0
        %474 = vmatpush2.bf16.msra.mxu0 0
        %475 = vmatprep.subr.bf16.mxu0 0
        %476 = vmatpush2.bf16.msra.mxu0 0
        %477 = vmatprep.subr.bf16.mxu0 0
        %478 = vmatpush2.bf16.msra.mxu0 0
        %479 = vmatprep.subr.bf16.mxu0 0
        %480 = vmatpush2.bf16.msra.mxu0 0
        %481 = vmatprep.mubr.bf16.mxu0 0
        %482 = vmatmul.mubr.bf16.gmra.mxu0 %v399
        %v483 = vpop.f32.mrf.mxu0
        %v484 = vadd.f32 %v393, %v483
        %v485 = vpop.f32.mrf.mxu0
        %v486 = vpop.f32.mrf.mxu0
        %v487 = vadd.f32 %v393, %v486
        %v488 = vpop.f32.mrf.mxu0
        %489 = vdwg.mxu0
        %490 = vst [vmem:[%s336] sm:$0xff] %v484
        %491 = vst [vmem:[%s336 + $0x8] sm:$0xff] %v487
        %v492 = vld [vmem:[#allocation2] sm:$0xff]
        %v493 = vld [vmem:[#allocation2 + $0x8] sm:$0xff]
        %494 = vmax.xlane.f32.xlu0 %v484
        %v495 = vpop.xlane.xlu0 %494
        %496 = vmax.xlane.f32.xlu0 %v487
        %v497 = vpop.xlane.xlu0 %496
        %v498 = vmax.f32 %v492, %v495
        %v499 = vmax.f32 %v493, %v497
        %v500 = vld [vmem:[#allocation3] sm:$0xff]
        %v501 = vld [vmem:[#allocation3 + $0x8] sm:$0xff]
        %v502 = vsub.f32 %v492, %v498
        %v503 = vsub.f32 %v493, %v499
        %v504 = vmul.f32 %v502, 1.442695
        %v505 = vpow.pop %v504
        %v506 = vmul.f32 %v503, 1.442695
        %v507 = vpow.pop %v506
        %v508 = vmul.f32 %v500, %v505
        %v509 = vmul.f32 %v501, %v507
        %511 = vset.pattern.permute.xlu0 0
        %512 = vperm.xlu0 %511, %v498
        %v513 = vpop.permute.xlu0 %512
        %516 = vset.pattern.permute.xlu0 0
        %517 = vperm.xlu0 %516, %v499
        %v518 = vpop.permute.xlu0 %517
        %v520 = vsub.f32 %v484, %v513
        %v521 = vsub.f32 %v487, %v518
        %v522 = vmul.f32 %v520, 1.442695
        %v523 = vpow.pop %v522
        %v524 = vmul.f32 %v521, 1.442695
        %v525 = vpow.pop %v524
        %526 = vadd.xlane.f32.xlu0 %v523
        %v527 = vpop.xlane.xlu0 %526
        %528 = vadd.xlane.f32.xlu0 %v525
        %v529 = vpop.xlane.xlu0 %528
        %v530 = vadd.f32 %v508, %v527
        %v531 = vadd.f32 %v509, %v529
        %vm532 = vcmask 7168
        %533 = vst.msk [vmem:[#allocation3] sm:$0xff] %vm532, %v530
        %534 = vst.msk [vmem:[#allocation3 + $0x8] sm:$0xff] %vm532, %v531
        %535 = vst.msk [vmem:[#allocation2] sm:$0xff] %vm532, %v498
        %536 = vst.msk [vmem:[#allocation2 + $0x8] sm:$0xff] %vm532, %v499
        %p537 = scmp.eq.s32.totalorder %s21, 1
        // Predicated region
        $region78: #{bert_img_action_sep_pretrain.3} parent=68 // pred_check
          %p538 = pneg %p537
        $region79: #{bert_img_action_sep_pretrain.3} parent=68 // pred_check_branch
          %540 = sbr.rel (%p538) target = $region81
        $region80: #{bert_img_action_sep_pretrain.3} parent=68 // pred_region
          %v541 = vld [vmem:[#allocation2] sm:$0xff]
          %v542 = vld [vmem:[#allocation2 + $0x8] sm:$0xff]
          %v543 = vld [vmem:[#allocation3] sm:$0xff]
          %v544 = vld [vmem:[#allocation3 + $0x8] sm:$0xff]
          %v545 = vlog2.pop %v543
          %v546 = vmul.f32 %v545, 0.6931472
          %v547 = vlog2.pop %v544
          %v548 = vmul.f32 %v547, 0.6931472
          %v549 = vadd.f32 %v541, %v546
          %v550 = vadd.f32 %v542, %v548
          %551 = vst.msk [vmem:[%s358] sm:$0xff] %vm532, %v549
          %552 = vst.msk [vmem:[%s358 + $0x8] sm:$0xff] %vm532, %v550
        $region81: #{bert_img_action_sep_pretrain.3} parent=68 // pred_fallthru
          _
        %s553 = sand.u32 %s116, 1
        %s554 = sand.u32 %s116, 1
        %s555 = smul.addr %s554, 16
        %s556 = scalar_lea.vmem [#allocation5], %s555
        %s557 = smul.u32 2, %s20
        %p558 = scmp.lt.s32.totalorder %s557, 1
        %s559 = scalar_select %p558, %s557, 1
        %s560 = smul.addr %s559, 8
        %s561 = scalar_lea.vmem %s4, %s560
        // Predicated region
        $region82: #{bert_img_action_sep_pretrain.3} parent=68 // pred_check
          %p562 = pneg %p126
        $region83: #{bert_img_action_sep_pretrain.3} parent=68 // pred_check_branch
          %564 = sbr.rel (%p562) target = $region85
        $region84: #{bert_img_action_sep_pretrain.3} parent=68 // pred_region
          %s565 = smul.u32 2, %s20
          %s566 = smul.addr %s565, 2
          %s567 = sadd.s32 %s21, %s566
          %s568 = smul.addr %s567, 8
          %s569 = scalar_lea.vmem %s3, %s568
          // Predicated region
          $region86: #{bert_img_action_sep_pretrain.3} parent=84 // pred_check
            _
          $region87: #{bert_img_action_sep_pretrain.3} parent=84 // pred_check_branch
            %571 = sbr.rel (0) target = $region89
          $region88: #{bert_img_action_sep_pretrain.3} parent=84 // pred_region
            // Predicated region
            $region90: #{bert_img_action_sep_pretrain.3} parent=88 // pred_check
              _
            $region91: #{bert_img_action_sep_pretrain.3} parent=88 // pred_check_branch
              %573 = sbr.rel (0) target = $region93
            $region92: #{bert_img_action_sep_pretrain.3} parent=88 // pred_region
              // Predicated region
              $region105: #{bert_img_action_sep_pretrain.3} parent=92 // pred_check
                _
              $region106: #{bert_img_action_sep_pretrain.3} parent=92 // pred_check_branch
                %591 = sbr.rel (0) target = $region108
              $region107: #{bert_img_action_sep_pretrain.3} parent=92 // pred_region
                loop: start=0, step=1, limit=1
                $region109: #{bert_img_action_sep_pretrain.3} parent=107 // loop_pre_header
                  _
                $region110: #{bert_img_action_sep_pretrain.3} parent=107 // loop_header
                  %s593 = sphi 0, %s597
                  %p594 = scmp.ge.s32.totalorder %s593, 1
                  %s598 = sphi %s556, %s556
                  %s599 = sphi %s569, %s569
                $region111: #{bert_img_action_sep_pretrain.3} parent=107 // loop_header_branch
                  %596 = sbr.rel (%p594) target = $region115
                $region112: #{bert_img_action_sep_pretrain.3} parent=107 // loop_body
                  %v600 = vld [vmem:[%s598] sm:$0xff]
                  %601 = vst [vmem:[%s599] sm:$0xff] %v600
                  %v602 = vld [vmem:[%s598 + $0x8] sm:$0xff]
                  %603 = vst [vmem:[%s599 + $0x10] sm:$0xff] %v602
                $region113: #{bert_img_action_sep_pretrain.3} parent=107 // loop_footer
                  %s597 = sadd.s32 1, %s593
                $region114: #{bert_img_action_sep_pretrain.3} parent=107 // loop_footer_branch
                  %592 = sbr.rel target = $region110
                $region115: #{bert_img_action_sep_pretrain.3} parent=107 // loop_exit
                  _
              $region108: #{bert_img_action_sep_pretrain.3} parent=92 // pred_fallthru
                _
              // Predicated region
              $region116: #{bert_img_action_sep_pretrain.3} parent=92 // pred_check
                _
              $region117: #{bert_img_action_sep_pretrain.3} parent=92 // pred_check_branch
                %605 = sbr.rel target = $region119
              $region118: #{bert_img_action_sep_pretrain.3} parent=92 // pred_region
                _
              $region119: #{bert_img_action_sep_pretrain.3} parent=92 // pred_fallthru
                _
            $region93: #{bert_img_action_sep_pretrain.3} parent=88 // pred_fallthru
              _
            // Predicated region
            $region94: #{bert_img_action_sep_pretrain.3} parent=88 // pred_check
              _
            $region95: #{bert_img_action_sep_pretrain.3} parent=88 // pred_check_branch
              %575 = sbr.rel target = $region97
            $region96: #{bert_img_action_sep_pretrain.3} parent=88 // pred_region
              %s577 = ssub.s32 256, 1
              loop: start=0, step=1, limit=1
              $region98: #{bert_img_action_sep_pretrain.3} parent=96 // loop_pre_header
                _
              $region99: #{bert_img_action_sep_pretrain.3} parent=96 // loop_header
                %s579 = sphi 0, %s583
                %p580 = scmp.ge.s32.totalorder %s579, 1
                %s584 = sphi %s556, %s556
                %s585 = sphi %s569, %s569
              $region100: #{bert_img_action_sep_pretrain.3} parent=96 // loop_header_branch
                %582 = sbr.rel (%p580) target = $region104
              $region101: #{bert_img_action_sep_pretrain.3} parent=96 // loop_body
                %v586 = vld [vmem:[%s584] sm:%s577]
                %587 = vst [vmem:[%s585] sm:%s577] %v586
                %v588 = vld [vmem:[%s584 + $0x8] sm:%s577]
                %589 = vst [vmem:[%s585 + $0x10] sm:%s577] %v588
              $region102: #{bert_img_action_sep_pretrain.3} parent=96 // loop_footer
                %s583 = sadd.s32 1, %s579
              $region103: #{bert_img_action_sep_pretrain.3} parent=96 // loop_footer_branch
                %578 = sbr.rel target = $region99
              $region104: #{bert_img_action_sep_pretrain.3} parent=96 // loop_exit
                _
            $region97: #{bert_img_action_sep_pretrain.3} parent=88 // pred_fallthru
              _
          $region89: #{bert_img_action_sep_pretrain.3} parent=84 // pred_fallthru
            _
          %606 = vnop
        $region85: #{bert_img_action_sep_pretrain.3} parent=68 // pred_fallthru
          _
        // Predicated region
        $region120: #{bert_img_action_sep_pretrain.3} parent=68 // pred_check
          %p607 = pneg %p152
        $region121: #{bert_img_action_sep_pretrain.3} parent=68 // pred_check_branch
          %609 = sbr.rel (%p607) target = $region123
        $region122: #{bert_img_action_sep_pretrain.3} parent=68 // pred_region
          %s610 = smul.u32 2, %s20
        $region123: #{bert_img_action_sep_pretrain.3} parent=68 // pred_fallthru
          _
        // Predicated region
        $region124: #{bert_img_action_sep_pretrain.3} parent=68 // pred_check
          %p611 = pneg %p152
        $region125: #{bert_img_action_sep_pretrain.3} parent=68 // pred_check_branch
          %613 = sbr.rel (%p611) target = $region127
        $region126: #{bert_img_action_sep_pretrain.3} parent=68 // pred_region
          %s614 = smul.u32 2, %s20
          %p615 = scmp.lt.s32.totalorder %s614, 1
          %s616 = scalar_select %p615, %s614, 1
          %s617 = smul.addr %s616, 8
          %s618 = scalar_lea.vmem %s4, %s617
        $region127: #{bert_img_action_sep_pretrain.3} parent=68 // pred_fallthru
          _
      $region69: #{bert_img_action_sep_pretrain.3} parent=5 // pred_fallthru
        _
      %p619 = scmp.le.s32.totalorder 2, %s11
      // Predicated region
      $region128: #{bert_img_action_sep_pretrain.3} parent=5 // pred_check
        %p620 = pneg %p619
      $region129: #{bert_img_action_sep_pretrain.3} parent=5 // pred_check_branch
        %622 = sbr.rel (%p620) target = $region131
      $region130: #{bert_img_action_sep_pretrain.3} parent=5 // pred_region
        %s623 = ssub.s32 %s11, 2
        // Predicated region
        $region132: #{bert_img_action_sep_pretrain.3} parent=130 // pred_check
          %p624 = pneg %p132
        $region133: #{bert_img_action_sep_pretrain.3} parent=130 // pred_check_branch
          %626 = sbr.rel (%p624) target = $region135
        $region134: #{bert_img_action_sep_pretrain.3} parent=130 // pred_region
          %s627 = sand.u32 %s117, 1
          %s628 = sand.u32 %s117, 1
          %s629 = smul.addr %s628, 16
          %s630 = scalar_lea.vmem [#allocation5], %s629
        $region135: #{bert_img_action_sep_pretrain.3} parent=130 // pred_fallthru
          _
      $region131: #{bert_img_action_sep_pretrain.3} parent=5 // pred_fallthru
        _
    $region6: #{bert_img_action_sep_pretrain.3} parent=1 // loop_footer
      %s15 = sadd.s32 1, %s11
    $region7: #{bert_img_action_sep_pretrain.3} parent=1 // loop_footer_branch
      %10 = sbr.rel target = $region3
    $region8: #{bert_img_action_sep_pretrain.3} parent=1 // loop_exit
      _

</llo_original>
